<compile_context>
chip_gen: v7x
topology: tpu7x:2x2x1
jax: 0.10.0
libtpu: 0.0.40
codegen_flags: <defaults>
</compile_context>

<pallas_src>
import functools

import jax
import jax.numpy as jnp
from jax.experimental import pallas as pl
from jax.experimental.pallas import tpu as pltpu

_LANE = 128
_BN_EPS = 1e-5


# ----------------------------- helpers -----------------------------

def _round_up(x, m):
    return (x + m - 1) // m * m


def _pad_axis(a, axis, target):
    pad = target - a.shape[axis]
    if pad <= 0:
        return a
    widths = [(0, 0)] * a.ndim
    widths[axis] = (0, pad)
    return jnp.pad(a, widths)


def _chip_config():
    """Chip-aware VMEM limit + row-tile target (v5e/v6e: 128 MiB physical, v7x: 64 MiB per TC)."""
    try:
        vmem_cap = int(pltpu.get_tpu_info().vmem_capacity_bytes)
    except Exception:  # conservative (v7x-sized) fallback
        vmem_cap = 64 * 1024 * 1024
    vmem_limit = min(vmem_cap * 3 // 4, 100 * 1024 * 1024)   # ~96 MiB on 128-MiB parts, ~48 MiB on v7x
    tm_target = 512 if vmem_cap >= (100 << 20) else 256
    return vmem_limit, tm_target


def _m_resident_fits(r_dim, n_pad, cout, ch, tm, tk, vmem_limit):
    """Conservative VMEM estimate for the layer kernel with a fully resident M slab."""
    b = 2 * r_dim * n_pad * cout * 2      # resident M (assume default double buffering)
    b += 2 * tm * tk * 1                  # A int8 tile
    b += 2 * tm * 4                       # inv_deg tile
    b += 2 * tm * ch * 2                  # h tile (bf16)
    b += 2 * ch * cout * 2                # skip weight (bf16)
    b += 6 * cout * 4                     # bias / bn scale / bn shift
    b += 2 * 2 * tm * cout * 2            # two bf16 outputs, double buffered
    b += tm * cout * 4                    # f32 accumulator scratch
    return b <= int(vmem_limit * 0.85)


# ----------------------------- Pallas kernels -----------------------------

def _linear_kernel(x_ref, w_ref, b_ref, o_ref, *, apply_relu):
    y = jnp.dot(x_ref[...], w_ref[...], preferred_element_type=jnp.float32) + b_ref[...]
    if apply_relu:
        y = jnp.maximum(y, 0.0)
    o_ref[...] = y.astype(o_ref.dtype)


def linear(x, w, b, *, tm, relu, out_dtype, vmem_limit):
    """Row-tiled dense layer: y = x @ w + b (optional ReLU); bf16 MXU, f32 accumulate."""
    n, cin = x.shape
    cout = w.shape[1]
    return pl.pallas_call(
        functools.partial(_linear_kernel, apply_relu=relu),
        out_shape=jax.ShapeDtypeStruct((n, cout), out_dtype),
        grid_spec=pltpu.PrefetchScalarGridSpec(
            num_scalar_prefetch=0,
            grid=(n // tm,),
            in_specs=[pl.BlockSpec((tm, cin), lambda i: (i, 0)),
                      pl.BlockSpec((cin, cout), lambda i: (0, 0)),
                      pl.BlockSpec((1, cout), lambda i: (0, 0))],
            out_specs=pl.BlockSpec((tm, cout), lambda i: (i, 0)),
        ),
        compiler_params=pltpu.CompilerParams(
            dimension_semantics=("parallel",),
            vmem_limit_bytes=vmem_limit),
    )(x, w, b)


def _project_kernel(x_ref, w_ref, m_ref):
    # M[r, row-tile] = x_tile @ W_r   (lane-dense in cout, bf16 on the MXU)
    m_ref[...] = jnp.dot(x_ref[...], w_ref[...],
                         preferred_element_type=jnp.float32).astype(m_ref.dtype)


def rgcn_project(x, w_full, *, tm, vmem_limit):
    """M_flat [R*n_pad, cout] bf16, rows r*n_pad + s hold (x @ W_r)[s]."""
    n_pad, cin = x.shape
    r_dim, _, cout = w_full.shape
    ni = n_pad // tm
    return pl.pallas_call(
        _project_kernel,
        out_shape=jax.ShapeDtypeStruct((r_dim * n_pad, cout), jnp.bfloat16),
        grid_spec=pltpu.PrefetchScalarGridSpec(
            num_scalar_prefetch=0,
            grid=(r_dim, ni),
            in_specs=[pl.BlockSpec((tm, cin), lambda r, i: (i, 0)),
                      pl.BlockSpec((None, cin, cout), lambda r, i: (r, 0, 0))],
            out_specs=pl.BlockSpec((tm, cout), lambda r, i, ni=ni: (r * ni + i, 0)),
        ),
        compiler_params=pltpu.CompilerParams(
            dimension_semantics=("parallel", "parallel"),
            vmem_limit_bytes=vmem_limit),
    )(x, w_full)


def _rgcn_layer_kernel(a_ref, m_ref, inv_ref, h_ref, wskip_ref, bias_ref,
                       scale_ref, shift_ref, pre_ref, post_ref, acc_ref,
                       *, apply_bn, m_resident, tk, n_pad):
    r = pl.program_id(1)
    k = pl.program_id(2)

    @pl.when((r == 0) & (k == 0))
    def _():
        # Fused skip connection (bf16 MXU) + combined conv+skip bias seed the f32 accumulator.
        acc_ref[...] = (jnp.dot(h_ref[...], wskip_ref[...],
                                preferred_element_type=jnp.float32)
                        + bias_ref[...])

    # int8 edge counts -> bf16 (VPU cast hides under DMA/MXU), bf16 MXU matmul, f32 accumulation,
    # exact f32 per-(relation, dst) mean normalization applied to the partial product.
    if m_resident:
        start = pl.multiple_of(r * n_pad + k * tk, tk)
        m_blk = m_ref[pl.ds(start, tk), :]
    else:
        m_blk = m_ref[...]
    a_blk = a_ref[...].astype(jnp.float32).astype(jnp.bfloat16)
    part = jnp.dot(a_blk, m_blk, preferred_element_type=jnp.float32)
    acc_ref[...] += inv_ref[...] * part

    @pl.when((r == pl.num_programs(1) - 1) & (k == pl.num_programs(2) - 1))
    def _():
        pre = acc_ref[...]
        pre_ref[...] = pre.astype(pre_ref.dtype)
        if apply_bn:
            post_ref[...] = jnp.maximum(pre * scale_ref[...] + shift_ref[...],
                                        0.0).astype(post_ref.dtype)
        else:
            post_ref[...] = pre.astype(post_ref.dtype)


def rgcn_layer(A8, M, inv_deg, h, w_skip, bias, bn_scale, bn_shift,
               *, tm, tk, apply_bn, m_resident, vmem_limit):
    """pre = sum_r (A_r/deg_r) @ M_r + bias + h @ w_skip ; post = relu(bn(pre)) (or pre if apply_bn=False)."""
    r_dim, n_pad, _ = A8.shape
    cout = M.shape[1]
    ch = h.shape[1]
    ni = n_pad // tm
    nk = n_pad // tk

    if m_resident:
        # Whole projected-feature slab stays VMEM-resident for the entire grid
        # (constant block index -> DMA'd once, no per-row-tile refetch of M).
        m_spec = pl.BlockSpec((r_dim * n_pad, cout), lambda i, r, k: (0, 0))
    else:
        # Fallback for graphs whose M does not fit the VMEM budget: stream (tk, cout) chunks.
        m_spec = pl.BlockSpec((tk, cout), lambda i, r, k, nk=nk: (r * nk + k, 0))

    kernel = functools.partial(_rgcn_layer_kernel, apply_bn=apply_bn,
                               m_resident=m_resident, tk=tk, n_pad=n_pad)
    return pl.pallas_call(
        kernel,
        out_shape=(jax.ShapeDtypeStruct((n_pad, cout), jnp.bfloat16),    # pre (next-layer skip input h)
                   jax.ShapeDtypeStruct((n_pad, cout), jnp.bfloat16)),   # post BN+ReLU (next conv input)
        grid_spec=pltpu.PrefetchScalarGridSpec(
            num_scalar_prefetch=0,
            grid=(ni, r_dim, nk),                                        # (r, k) are the reduction axes
            in_specs=[
                pl.BlockSpec((None, tm, tk), lambda i, r, k: (r, i, k)),   # A edge counts, int8
                m_spec,                                                    # projected features (bf16)
                pl.BlockSpec((None, tm, 1), lambda i, r, k: (r, i, 0)),    # 1/deg per (r, dst), f32
                pl.BlockSpec((tm, ch), lambda i, r, k: (i, 0)),            # h tile (bf16 skip input)
                pl.BlockSpec((ch, cout), lambda i, r, k: (0, 0)),          # skip weight (bf16)
                pl.BlockSpec((1, cout), lambda i, r, k: (0, 0)),           # conv+skip bias (f32)
                pl.BlockSpec((1, cout), lambda i, r, k: (0, 0)),           # bn scale (f32)
                pl.BlockSpec((1, cout), lambda i, r, k: (0, 0)),           # bn shift (f32)
            ],
            out_specs=[pl.BlockSpec((tm, cout), lambda i, r, k: (i, 0)),
                       pl.BlockSpec((tm, cout), lambda i, r, k: (i, 0))],
            scratch_shapes=[pltpu.VMEM((tm, cout), jnp.float32)],
        ),
        compiler_params=pltpu.CompilerParams(
            dimension_semantics=("parallel", "arbitrary", "arbitrary"),
            vmem_limit_bytes=vmem_limit),
    )(A8, M, inv_deg, h, w_skip, bias, bn_scale, bn_shift)


# ----------------------------- glue (plain JAX) -----------------------------

def build_relation_adjacency(edge_index, edge_type, num_nodes, num_relations):
    """Per-relation edge counts (int8) and per-(relation, dst) inverse in-degree (f32) for 'mean' aggr."""
    src, dst = edge_index[0], edge_index[1]
    counts = jnp.zeros((num_relations, num_nodes, num_nodes), jnp.int32)
    counts = counts.at[edge_type, dst, src].add(1)
    deg = counts.sum(axis=-1, keepdims=True)
    inv_deg = 1.0 / jnp.maximum(deg, 1).astype(jnp.float32)
    return counts.astype(jnp.int8), inv_deg


def init_linear_params(key, cin, cout):
    k1, k2 = jax.random.split(key)
    return {
        "w": jax.random.normal(k1, (cin, cout), jnp.float32) / jnp.sqrt(float(cin)),
        "b": 0.01 * jax.random.normal(k2, (cout,), jnp.float32),
    }


def init_conv_params(key, cin, cout, num_relations, num_bases):
    k1, k2, k3 = jax.random.split(key, 3)
    return {
        "basis": jax.random.normal(k1, (num_bases, cin, cout), jnp.float32) / jnp.sqrt(float(cin)),
        "comp": jax.random.normal(k2, (num_relations, num_bases), jnp.float32),
        "bias": 0.01 * jax.random.normal(k3, (cout,), jnp.float32),
    }


def init_bn_params(key, c):
    k1, k2 = jax.random.split(key)
    return {
        "gamma": 1.0 + 0.1 * jax.random.normal(k1, (c,), jnp.float32),
        "beta": 0.1 * jax.random.normal(k2, (c,), jnp.float32),
        "mean": jnp.zeros((c,), jnp.float32),
        "var": jnp.ones((c,), jnp.float32),
    }


def init_rgcn_params(key, in_ch, hid, out_ch, num_relations, num_bases, num_layers, linear_l):
    keys = iter(jax.random.split(key, 4 * num_layers + 8))
    p = {"convs": [], "skips": [], "bns": []}
    if linear_l:
        p["lin1"] = init_linear_params(next(keys), in_ch, hid)
        first_in = hid
    else:
        first_in = in_ch
    p["convs"].append(init_conv_params(next(keys), first_in, hid, num_relations, num_bases))
    p["skips"].append(init_linear_params(next(keys), first_in, hid))
    p["bns"].append(init_bn_params(next(keys), hid))
    for _ in range(num_layers - 2):
        p["convs"].append(init_conv_params(next(keys), hid, hid, num_relations, num_bases))
        p["skips"].append(init_linear_params(next(keys), hid, hid))
        p["bns"].append(init_bn_params(next(keys), hid))
    p["convs"].append(init_conv_params(next(keys), hid, hid, num_relations, num_bases))
    p["skips"].append(init_linear_params(next(keys), hid, hid))
    if linear_l:
        p["bns"].append(init_bn_params(next(keys), hid))
        p["lin2"] = init_linear_params(next(keys), hid, out_ch)
    return p


def prepare_params(params, in_channels, hidden, out_channels, linear_l):
    """Fold basis decomposition & BN into kernel-ready, lane-padded (multiple of 128) bf16/f32 arrays."""
    hid_p = _round_up(hidden, _LANE)
    in_p = _round_up(in_channels, _LANE)
    prepared = {"hidden_logical": hidden, "hidden_padded": hid_p, "in_padded": in_p}

    if linear_l:
        first_in = hid_p
        prepared["lin1"] = {
            "w": _pad_axis(_pad_axis(params["lin1"]["w"], 0, in_p), 1, hid_p).astype(jnp.bfloat16),
            "b": _pad_axis(params["lin1"]["b"], 0, hid_p).reshape(1, hid_p).astype(jnp.float32),
        }
        out_p = _round_up(out_channels, _LANE)
        w2 = _pad_axis(_pad_axis(params["lin2"]["w"], 0, hid_p), 1, out_p)
        prepared["lin2"] = {
            "w": w2.astype(jnp.bfloat16),
            "b": _pad_axis(params["lin2"]["b"], 0, out_p).reshape(1, out_p).astype(jnp.float32),
        }
        prepared["out_logical"] = out_channels
    else:
        first_in = in_p
    prepared["first_in_padded"] = first_in

    layers = []
    for li, (conv, skip) in enumerate(zip(params["convs"], params["skips"])):
        cin = first_in if li == 0 else hid_p
        # basis decomposition: W_r = sum_b comp[r, b] * basis[b]   (tiny parameter math -> glue)
        w_full = jnp.einsum("rb,bio->rio", conv["comp"], conv["basis"])
        w_full = _pad_axis(_pad_axis(w_full, 2, hid_p), 1, cin).astype(jnp.bfloat16)
        w_skip = _pad_axis(_pad_axis(skip["w"], 1, hid_p), 0, cin).astype(jnp.bfloat16)   # bf16 MXU skip
        bias = _pad_axis(conv["bias"] + skip["b"], 0, hid_p).reshape(1, hid_p).astype(jnp.float32)
        if li < len(params["bns"]):
            bn = params["bns"][li]
            scale = bn["gamma"] * jax.lax.rsqrt(bn["var"] + _BN_EPS)
            shift = bn["beta"] - bn["mean"] * scale
            scale = _pad_axis(scale, 0, hid_p).reshape(1, hid_p).astype(jnp.float32)
            shift = _pad_axis(shift, 0, hid_p).reshape(1, hid_p).astype(jnp.float32)
            has_bn = True
        else:
            scale = jnp.zeros((1, hid_p), jnp.float32)
            shift = jnp.zeros((1, hid_p), jnp.float32)
            has_bn = False
        layers.append({"w": w_full, "skip_w": w_skip, "bias": bias,
                       "bn_scale": scale, "bn_shift": shift, "has_bn": has_bn})
    prepared["layers"] = layers
    return prepared


def rgcn_forward(prepared, x, A8, inv_deg, linear_l):
    """Fused RGCN forward; returns (h, out) matching the PyTorch module (inference mode)."""
    n, _ = x.shape
    vmem_limit, tm_target = _chip_config()
    tm = min(tm_target, _round_up(n, _LANE))   # multiple of 128 -> lane/sublane-clean A/M/x tiles
    tk = tm
    n_pad = _round_up(n, tm)
    hid = prepared["hidden_logical"]
    hid_p = prepared["hidden_padded"]
    r_dim = A8.shape[0]

    xp = _pad_axis(_pad_axis(x, 0, n_pad), 1, prepared["in_padded"]).astype(jnp.bfloat16)
    A8p = _pad_axis(_pad_axis(A8, 1, n_pad), 2, n_pad)             # int8 edge counts
    invp = _pad_axis(inv_deg, 1, n_pad)                            # f32, padded dst rows -> 0

    ch_max = max(prepared["first_in_padded"], hid_p)
    m_resident = _m_resident_fits(r_dim, n_pad, hid_p, ch_max, tm, tk, vmem_limit)

    layers = prepared["layers"]
    if linear_l:
        xcur = linear(xp, prepared["lin1"]["w"], prepared["lin1"]["b"],
                      tm=tm, relu=True, out_dtype=jnp.bfloat16, vmem_limit=vmem_limit)
        h = xcur                                                   # bf16 skip input
        pre = None
        for layer in layers:
            M = rgcn_project(xcur, layer["w"], tm=tm, vmem_limit=vmem_limit)
            pre, post = rgcn_layer(A8p, M, invp, h, layer["skip_w"], layer["bias"],
                                   layer["bn_scale"], layer["bn_shift"],
                                   tm=tm, tk=tk, apply_bn=True,
                                   m_resident=m_resident, vmem_limit=vmem_limit)
            h = pre                                                # next skip input (bf16)
            xcur = post                                            # next conv input (bf16)
        out = linear(xcur, prepared["lin2"]["w"], prepared["lin2"]["b"],
                     tm=tm, relu=False, out_dtype=jnp.float32, vmem_limit=vmem_limit)
        return (pre[:n, :hid].astype(jnp.float32),
                out[:n, :prepared["out_logical"]])
    else:
        h = xp
        xcur = xp
        out_full = None
        for layer in layers:
            M = rgcn_project(xcur, layer["w"], tm=tm, vmem_limit=vmem_limit)
            new_pre, post = rgcn_layer(A8p, M, invp, h, layer["skip_w"], layer["bias"],
                                       layer["bn_scale"], layer["bn_shift"],
                                       tm=tm, tk=tk, apply_bn=layer["has_bn"],
                                       m_resident=m_resident, vmem_limit=vmem_limit)
            if layer["has_bn"]:
                h = new_pre
                xcur = post
            else:                                                  # last conv: no BN/ReLU
                out_full = new_pre
        return (h[:n, :hid].astype(jnp.float32),
                out_full[:n, :hid].astype(jnp.float32))


# ----------------------------- pure-JAX reference (for correctness check) -----------------------------

def rgcn_reference(params, x, A, linear_l):
    def lin(p, v):
        return v @ p["w"] + p["b"]

    def conv(c, v):
        w = jnp.einsum("rb,bio->rio", c["comp"], c["basis"])
        return jnp.einsum("rds,sc,rco->do", A, v, w) + c["bias"]

    def bn(p, v):
        return (v - p["mean"]) * jax.lax.rsqrt(p["var"] + _BN_EPS) * p["gamma"] + p["beta"]

    if linear_l:
        v = jax.nn.relu(lin(params["lin1"], x))
        h = v
        for c, s, b in zip(params["convs"], params["skips"], params["bns"]):
            v = conv(c, v) + lin(s, h)
            h = v
            v = jax.nn.relu(bn(b, v))
        v = lin(params["lin2"], v)
    else:
        h = x
        v = x
        for c, s, b in zip(params["convs"][:-1], params["skips"][:-1], params["bns"]):
            v = conv(c, v) + lin(s, h)
            h = v
            v = jax.nn.relu(bn(b, v))
        v = conv(params["convs"][-1], v) + lin(params["skips"][-1], h)
    return h, v


# ----------------------------- demo -----------------------------

if __name__ == "__main__":
    key = jax.random.PRNGKey(0)
    k_feat, k_src, k_dst, k_rel, k_par = jax.random.split(key, 5)

    num_nodes, num_edges = 16, 48
    in_channels, hidden_channels, out_channels = 8, 32, 4
    num_relations, num_bases, num_layers = 3, 2, 3

    x = jax.random.normal(k_feat, (num_nodes, in_channels), jnp.float32)
    edge_index = jnp.stack([
        jax.random.randint(k_src, (num_edges,), 0, num_nodes),
        jax.random.randint(k_dst, (num_edges,), 0, num_nodes),
    ], axis=0)
    edge_type = jax.random.randint(k_rel, (num_edges,), 0, num_relations)

    A8, inv_deg = build_relation_adjacency(edge_index, edge_type, num_nodes, num_relations)
    A_norm = A8.astype(jnp.float32) * inv_deg          # dense mean-normalized A for the reference

    for linear_l in (True, False):
        params = init_rgcn_params(k_par, in_channels, hidden_channels, out_channels,
                                  num_relations, num_bases, num_layers, linear_l)
        prepared = prepare_params(params, in_channels, hidden_channels, out_channels, linear_l)

        h, out = rgcn_forward(prepared, x, A8, inv_deg, linear_l)
        jax.block_until_ready((h, out))

        h_ref, out_ref = rgcn_reference(params, x, A_norm, linear_l)
        assert h.shape == h_ref.shape and out.shape == out_ref.shape
        assert bool(jnp.allclose(h, h_ref, atol=2e-1, rtol=2e-1)), "h mismatch vs reference"
        assert bool(jnp.allclose(out, out_ref, atol=2e-1, rtol=2e-1)), "out mismatch vs reference"

    print("KERNEL_OK")
</pallas_src>

<mosaic_0001>
module attributes {stable_mosaic.version = 11 : i64} {
  func.func @_linear_kernel(%arg0: i32, %arg1: memref<128x128xbf16, #tpu.memory_space<vmem>>, %arg2: memref<128x128xbf16, #tpu.memory_space<vmem>>, %arg3: memref<1x128xf32, #tpu.memory_space<vmem>>, %arg4: memref<128x128xbf16, #tpu.memory_space<vmem>>) attributes {dimension_semantics = [#tpu.dimension_semantics<parallel>], iteration_bounds = array<i64: 1>, scalar_prefetch = 0 : i64, scratch_operands = 0 : i64, tpu.core_type = #tpu.core_type<tc>, window_params = [{transform_indices = @transform_0, window_bounds = array<i64: 128, 128>}, {pipeline_mode = #tpu.pipeline_mode<synchronous>, transform_indices = @transform_1, window_bounds = array<i64: 128, 128>}, {pipeline_mode = #tpu.pipeline_mode<synchronous>, transform_indices = @transform_2, window_bounds = array<i64: 1, 128>}, {transform_indices = @transform_3, window_bounds = array<i64: 128, 128>}]} {
    %c0 = arith.constant 0 : index
    %c0_0 = arith.constant 0 : index
    %0 = vector.load %arg1[%c0, %c0_0] : memref<128x128xbf16, #tpu.memory_space<vmem>>, vector<128x128xbf16>
    %c0_1 = arith.constant 0 : index
    %c0_2 = arith.constant 0 : index
    %1 = vector.load %arg2[%c0_1, %c0_2] : memref<128x128xbf16, #tpu.memory_space<vmem>>, vector<128x128xbf16>
    %cst = arith.constant dense<0.000000e+00> : vector<128x128xf32>
    %2 = tpu.matmul %0, %1, %cst {dimension_numbers = #tpu.dot_dimension_numbers<[1], [0], [0], [1], [0, 0, 1, 1], [], []>} : vector<128x128xbf16>, vector<128x128xbf16>, vector<128x128xf32> -> vector<128x128xf32>
    %c0_3 = arith.constant 0 : index
    %c0_4 = arith.constant 0 : index
    %3 = vector.load %arg3[%c0_3, %c0_4] : memref<1x128xf32, #tpu.memory_space<vmem>>, vector<1x128xf32>
    %4 = vector.broadcast %3 : vector<1x128xf32> to vector<128x128xf32>
    %5 = arith.addf %2, %4 : vector<128x128xf32>
    %cst_5 = arith.constant 0.000000e+00 : f32
    %6 = vector.broadcast %cst_5 : f32 to vector<128x128xf32>
    %7 = arith.maximumf %5, %6 : vector<128x128xf32>
    %8 = arith.truncf %7 : vector<128x128xf32> to vector<128x128xbf16>
    %c0_6 = arith.constant 0 : index
    %c0_7 = arith.constant 0 : index
    %9 = vector.load %arg4[%c0_6, %c0_7] : memref<128x128xbf16, #tpu.memory_space<vmem>>, vector<128x128xbf16>
    tpu.vector_store %arg4[%c0_6, %c0_7], %8 {strides = array<i32>} : memref<128x128xbf16, #tpu.memory_space<vmem>>, vector<128x128xbf16>,
    return
  }
  func.func @transform_0(%arg0: i32) -> (i32, i32) {
    %c0_i32 = arith.constant 0 : i32
    %c0_i32_0 = arith.constant 0 : i32
    return %arg0, %c0_i32 : i32, i32
  }
  func.func @transform_1(%arg0: i32) -> (i32, i32) {
    %c0_i32 = arith.constant 0 : i32
    %c0_i32_0 = arith.constant 0 : i32
    %c0_i32_1 = arith.constant 0 : i32
    return %c0_i32, %c0_i32_0 : i32, i32
  }
  func.func @transform_2(%arg0: i32) -> (i32, i32) {
    %c0_i32 = arith.constant 0 : i32
    %c0_i32_0 = arith.constant 0 : i32
    %c0_i32_1 = arith.constant 0 : i32
    return %c0_i32, %c0_i32_0 : i32, i32
  }
  func.func @transform_3(%arg0: i32) -> (i32, i32) {
    %c0_i32 = arith.constant 0 : i32
    %c0_i32_0 = arith.constant 0 : i32
    return %arg0, %c0_i32 : i32, i32
  }
}

</mosaic_0001>

<llo_original>
// kernel: tpu_custom_call.1
$region0: #{tpu_custom_call.1}
  #allocation0 [shape = 'u32[]', space=smem, size = 0x4, offset = 0x4, fixed_abs, tag = 'smem constant byte address 0x4 - core index']
  #allocation1 [shape = 'u32[144,128]{1,0:T(1,128)}', space=vmem, size = 0x12000, scoped, tag = 'internal scratch']
  %s0 = inlined_call_operand.hbm [shape: bf16[128,128], index: 0, kind: input, shape index: {}]
  %s1 = inlined_call_operand.hbm [shape: bf16[128,128], index: 1, kind: input, shape index: {}]
  %s2 = inlined_call_operand.vmem [shape: f32[1,128], index: 2, kind: input, shape index: {}]
  %s3 = inlined_call_operand.hbm [shape: bf16[128,128], index: 3, kind: output, shape index: {}]
  %s4 = sld [smem:[#allocation0]]
  $region30: #{tpu_custom_call.1} parent=0
    _
  %s6 = ssub.s32 1, %s4
  %s7 = scalar_select 0, %s6, %s4
  $region1: #{tpu_custom_call.1} parent=0
    #allocation2 [shape = 'u8[32768]{0}', space=vmem, size = 0x8000, scoped, tag = 'input window, operand 0, single buffered']
    #allocation3 [shape = 's32[1]{0}', space=sflag, size = 0x4, scoped, tag = 'scoped memory for tpu_custom_call.1']
    #allocation4 [shape = 's32[1]{0}', space=sflag, size = 0x4, scoped, tag = 'scoped memory for tpu_custom_call.1']
    #allocation5 [shape = 'u8[32768]{0}', space=vmem, size = 0x8000, scoped, tag = 'input window, operand 1, single buffered']
    #allocation6 [shape = 's32[1]{0}', space=sflag, size = 0x4, scoped, tag = 'scoped memory for tpu_custom_call.1']
    #allocation7 [shape = 'u8[32768]{0}', space=vmem, size = 0x8000, scoped, tag = 'output window, operand 0, single buffered']
    %8 = vsyncpa [#allocation3], 0
    %9 = vsyncpa [#allocation6], 0
    %10 = vsyncpa [#allocation4], 0
    // Predicated region
    $region2: #{tpu_custom_call.1} parent=1 // pred_check
      _
    $region3: #{tpu_custom_call.1} parent=1 // pred_check_branch
      %12 = sbr.rel (0) target = $region5
    $region4: #{tpu_custom_call.1} parent=1 // pred_region
      %s14 = ssub.s32 1024, 1024
      %15 = vsyncadd [#allocation3], %s14
      %s16 = sshll.u32 [#allocation2], 4
      %s17 = int_to_ptr.vmem [resolvable:$true] %s16
      %22 = dma.hbm_to_vmem [thread:$0]  %s0, 1024, %s17, [#allocation3], 64, 64, 4
    $region5: #{tpu_custom_call.1} parent=1 // pred_fallthru
      _
    // Predicated region
    $region6: #{tpu_custom_call.1} parent=1 // pred_check
      _
    $region7: #{tpu_custom_call.1} parent=1 // pred_check_branch
      %24 = sbr.rel (0) target = $region9
    $region8: #{tpu_custom_call.1} parent=1 // pred_region
      %s26 = ssub.s32 1024, 1024
      %27 = vsyncadd [#allocation6], %s26
      %s28 = sshll.u32 [#allocation5], 4
      %s29 = int_to_ptr.vmem [resolvable:$true] %s28
      %34 = dma.hbm_to_vmem [thread:$0]  %s1, 1024, %s29, [#allocation6], 64, 64, 4
    $region9: #{tpu_custom_call.1} parent=1 // pred_fallthru
      _
    // Predicated region
    $region10: #{tpu_custom_call.1} parent=1 // pred_check
      _
    $region11: #{tpu_custom_call.1} parent=1 // pred_check_branch
      %36 = sbr.rel (0) target = $region13
    $region12: #{tpu_custom_call.1} parent=1 // pred_region
      _
    $region13: #{tpu_custom_call.1} parent=1 // pred_fallthru
      _
    // Predicated region
    $region14: #{tpu_custom_call.1} parent=1 // pred_check
      _
    $region15: #{tpu_custom_call.1} parent=1 // pred_check_branch
      %38 = sbr.rel (0) target = $region17
    $region16: #{tpu_custom_call.1} parent=1 // pred_region
      %39 = dma.done [#allocation3], 1024
    $region17: #{tpu_custom_call.1} parent=1 // pred_fallthru
      _
    // Predicated region
    $region18: #{tpu_custom_call.1} parent=1 // pred_check
      _
    $region19: #{tpu_custom_call.1} parent=1 // pred_check_branch
      %41 = sbr.rel (0) target = $region21
    $region20: #{tpu_custom_call.1} parent=1 // pred_region
      %42 = dma.done [#allocation6], 1024
    $region21: #{tpu_custom_call.1} parent=1 // pred_fallthru
      _
    %v44 = vld [vmem:[#allocation2] sm:$0xf]
    %v45 = vld [vmem:[#allocation2 + $0x4] sm:$0xf]
    %v46 = vld [vmem:[#allocation2 + $0x8] sm:$0xf]
    %v47 = vld [vmem:[#allocation2 + $0xc] sm:$0xf]
    %v48 = vld [vmem:[#allocation2 + $0x10] sm:$0xf]
    %v49 = vld [vmem:[#allocation2 + $0x14] sm:$0xf]
    %v50 = vld [vmem:[#allocation2 + $0x18] sm:$0xf]
    %v51 = vld [vmem:[#allocation2 + $0x1c] sm:$0xf]
    %v52 = vld [vmem:[#allocation2 + $0x20] sm:$0xf]
    %v53 = vld [vmem:[#allocation2 + $0x24] sm:$0xf]
    %v54 = vld [vmem:[#allocation2 + $0x28] sm:$0xf]
    %v55 = vld [vmem:[#allocation2 + $0x2c] sm:$0xf]
    %v56 = vld [vmem:[#allocation2 + $0x30] sm:$0xf]
    %v57 = vld [vmem:[#allocation2 + $0x34] sm:$0xf]
    %v58 = vld [vmem:[#allocation2 + $0x38] sm:$0xf]
    %v59 = vld [vmem:[#allocation2 + $0x3c] sm:$0xf]
    %v60 = vld [vmem:[#allocation5] sm:$0xf]
    %v61 = vld [vmem:[#allocation5 + $0x4] sm:$0xf]
    %v62 = vld [vmem:[#allocation5 + $0x8] sm:$0xf]
    %v63 = vld [vmem:[#allocation5 + $0xc] sm:$0xf]
    %v64 = vld [vmem:[#allocation5 + $0x10] sm:$0xf]
    %v65 = vld [vmem:[#allocation5 + $0x14] sm:$0xf]
    %v66 = vld [vmem:[#allocation5 + $0x18] sm:$0xf]
    %v67 = vld [vmem:[#allocation5 + $0x1c] sm:$0xf]
    %v68 = vld [vmem:[#allocation5 + $0x20] sm:$0xf]
    %v69 = vld [vmem:[#allocation5 + $0x24] sm:$0xf]
    %v70 = vld [vmem:[#allocation5 + $0x28] sm:$0xf]
    %v71 = vld [vmem:[#allocation5 + $0x2c] sm:$0xf]
    %v72 = vld [vmem:[#allocation5 + $0x30] sm:$0xf]
    %v73 = vld [vmem:[#allocation5 + $0x34] sm:$0xf]
    %v74 = vld [vmem:[#allocation5 + $0x38] sm:$0xf]
    %v75 = vld [vmem:[#allocation5 + $0x3c] sm:$0xf]
    %v76 = vld [vmem:[%s2] sm:$0x1]
    %v78 = vlaneseq
    %v79 = vshrl.u32 %v78, 7
    %v80 = vsub.s32 0, %v79
    %v81 = vrot.slane %v76, %v80
    %v99 = vunpack.c.l.b16 %v44
    %v100 = vunpack.c.l.b16 %v45
    %v101 = vunpack.c.l.b16 %v46
    %v102 = vunpack.c.l.b16 %v47
    %v103 = vunpack.c.l.b16 %v48
    %v104 = vunpack.c.l.b16 %v49
    %v105 = vunpack.c.l.b16 %v50
    %v106 = vunpack.c.l.b16 %v51
    %v107 = vunpack.c.l.b16 %v52
    %v108 = vunpack.c.l.b16 %v53
    %v109 = vunpack.c.l.b16 %v54
    %v110 = vunpack.c.l.b16 %v55
    %v111 = vunpack.c.l.b16 %v56
    %v112 = vunpack.c.l.b16 %v57
    %v113 = vunpack.c.l.b16 %v58
    %v114 = vunpack.c.l.b16 %v59
    %v115 = vpack.c.b16 %v100, %v99
    %v116 = vpack.c.b16 %v102, %v101
    %v117 = vpack.c.b16 %v104, %v103
    %v118 = vpack.c.b16 %v106, %v105
    %v119 = vpack.c.b16 %v108, %v107
    %v120 = vpack.c.b16 %v110, %v109
    %v121 = vpack.c.b16 %v112, %v111
    %v122 = vpack.c.b16 %v114, %v113
    %v147 = vunpack.c.l.b16 %v60
    %v148 = vunpack.c.l.b16 %v61
    %v149 = vunpack.c.l.b16 %v62
    %v150 = vunpack.c.l.b16 %v63
    %v151 = vunpack.c.l.b16 %v64
    %v152 = vunpack.c.l.b16 %v65
    %v153 = vunpack.c.l.b16 %v66
    %v154 = vunpack.c.l.b16 %v67
    %v155 = vunpack.c.l.b16 %v68
    %v156 = vunpack.c.l.b16 %v69
    %v157 = vunpack.c.l.b16 %v70
    %v158 = vunpack.c.l.b16 %v71
    %v159 = vunpack.c.l.b16 %v72
    %v160 = vunpack.c.l.b16 %v73
    %v161 = vunpack.c.l.b16 %v74
    %v162 = vunpack.c.l.b16 %v75
    %v163 = vpack.c.b16 %v148, %v147
    %v164 = vpack.c.b16 %v150, %v149
    %v165 = vpack.c.b16 %v152, %v151
    %v166 = vpack.c.b16 %v154, %v153
    %v167 = vpack.c.b16 %v156, %v155
    %v168 = vpack.c.b16 %v158, %v157
    %v169 = vpack.c.b16 %v160, %v159
    %v170 = vpack.c.b16 %v162, %v161
    %179 = vmatprep.subr.bf16.mxu0 0
    %180 = vmatpush1.bf16.msra.mxu0 %v163
    %181 = vmatprep.subr.bf16.mxu0 0
    %182 = vmatpush1.bf16.msra.mxu0 %v164
    %183 = vmatprep.subr.bf16.mxu0 0
    %184 = vmatpush1.bf16.msra.mxu0 %v165
    %185 = vmatprep.subr.bf16.mxu0 0
    %186 = vmatpush1.bf16.msra.mxu0 %v166
    %187 = vmatprep.subr.bf16.mxu0 0
    %188 = vmatpush1.bf16.msra.mxu0 %v167
    %189 = vmatprep.subr.bf16.mxu0 0
    %190 = vmatpush1.bf16.msra.mxu0 %v168
    %191 = vmatprep.subr.bf16.mxu0 0
    %192 = vmatpush1.bf16.msra.mxu0 %v169
    %193 = vmatprep.subr.bf16.mxu0 0
    %194 = vmatpush1.bf16.msra.mxu0 %v170
    %195 = vmatprep.subr.bf16.mxu0 0
    %196 = vmatpush1.bf16.msra.mxu0 0
    %197 = vmatprep.subr.bf16.mxu0 0
    %198 = vmatpush1.bf16.msra.mxu0 0
    %199 = vmatprep.subr.bf16.mxu0 0
    %200 = vmatpush1.bf16.msra.mxu0 0
    %201 = vmatprep.subr.bf16.mxu0 0
    %202 = vmatpush1.bf16.msra.mxu0 0
    %203 = vmatprep.subr.bf16.mxu0 0
    %204 = vmatpush1.bf16.msra.mxu0 0
    %205 = vmatprep.subr.bf16.mxu0 0
    %206 = vmatpush1.bf16.msra.mxu0 0
    %207 = vmatprep.subr.bf16.mxu0 0
    %208 = vmatpush1.bf16.msra.mxu0 0
    %209 = vmatprep.subr.bf16.mxu0 0
    %210 = vmatpush1.bf16.msra.mxu0 0
    %211 = vmatprep.mubr.bf16.mxu0 0
    %212 = vmatmul.mubr.bf16.gmra.mrb[0].mxu0 %v115
    %v213 = vpop.f32.mrb[0].mxu0
    %v214 = vadd.f32 %v81, %v213
    %v215 = vpop.f32.mrb[0].mxu0
    %v216 = vpop.f32.mrb[0].mxu0
    %v217 = vadd.f32 %v81, %v216
    %v218 = vpop.f32.mrb[0].mxu0
    %219 = vmatprep.mubr.bf16.mxu0 0
    %220 = vmatmul.mubr.bf16.gmra.mrb[0].mxu0 %v116
    %v221 = vpop.f32.mrb[0].mxu0
    %v222 = vadd.f32 %v81, %v221
    %v223 = vpop.f32.mrb[0].mxu0
    %v224 = vpop.f32.mrb[0].mxu0
    %v225 = vadd.f32 %v81, %v224
    %v226 = vpop.f32.mrb[0].mxu0
    %227 = vmatprep.mubr.bf16.mxu0 0
    %228 = vmatmul.mubr.bf16.gmra.mrb[0].mxu0 %v117
    %v229 = vpop.f32.mrb[0].mxu0
    %v230 = vadd.f32 %v81, %v229
    %v231 = vpop.f32.mrb[0].mxu0
    %v232 = vpop.f32.mrb[0].mxu0
    %v233 = vadd.f32 %v81, %v232
    %v234 = vpop.f32.mrb[0].mxu0
    %235 = vmatprep.mubr.bf16.mxu0 0
    %236 = vmatmul.mubr.bf16.gmra.mrb[0].mxu0 %v118
    %v237 = vpop.f32.mrb[0].mxu0
    %v238 = vadd.f32 %v81, %v237
    %v239 = vpop.f32.mrb[0].mxu0
    %v240 = vpop.f32.mrb[0].mxu0
    %v241 = vadd.f32 %v81, %v240
    %v242 = vpop.f32.mrb[0].mxu0
    %243 = vmatprep.mubr.bf16.mxu0 0
    %244 = vmatmul.mubr.bf16.gmra.mrb[0].mxu0 %v119
    %v245 = vpop.f32.mrb[0].mxu0
    %v246 = vadd.f32 %v81, %v245
    %v247 = vpop.f32.mrb[0].mxu0
    %v248 = vpop.f32.mrb[0].mxu0
    %v249 = vadd.f32 %v81, %v248
    %v250 = vpop.f32.mrb[0].mxu0
    %251 = vmatprep.mubr.bf16.mxu0 0
    %252 = vmatmul.mubr.bf16.gmra.mrb[0].mxu0 %v120
    %v253 = vpop.f32.mrb[0].mxu0
    %v254 = vadd.f32 %v81, %v253
    %v255 = vpop.f32.mrb[0].mxu0
    %v256 = vpop.f32.mrb[0].mxu0
    %v257 = vadd.f32 %v81, %v256
    %v258 = vpop.f32.mrb[0].mxu0
    %259 = vmatprep.mubr.bf16.mxu0 0
    %260 = vmatmul.mubr.bf16.gmra.mrb[0].mxu0 %v121
    %v261 = vpop.f32.mrb[0].mxu0
    %v262 = vadd.f32 %v81, %v261
    %v263 = vpop.f32.mrb[0].mxu0
    %v264 = vpop.f32.mrb[0].mxu0
    %v265 = vadd.f32 %v81, %v264
    %v266 = vpop.f32.mrb[0].mxu0
    %267 = vmatprep.mubr.bf16.mxu0 0
    %268 = vmatmul.mubr.bf16.gmra.mrb[0].mxu0 %v122
    %v269 = vpop.f32.mrb[0].mxu0
    %v270 = vadd.f32 %v81, %v269
    %v271 = vpop.f32.mrb[0].mxu0
    %v272 = vpop.f32.mrb[0].mxu0
    %v273 = vadd.f32 %v81, %v272
    %v274 = vpop.f32.mrb[0].mxu0
    %275 = vdwg.mxu0
    %v276 = vmax.f32 %v214, 0.0
    %v277 = vmax.f32 %v217, 0.0
    %v278 = vmax.f32 %v222, 0.0
    %v279 = vmax.f32 %v225, 0.0
    %v280 = vmax.f32 %v230, 0.0
    %v281 = vmax.f32 %v233, 0.0
    %v282 = vmax.f32 %v238, 0.0
    %v283 = vmax.f32 %v241, 0.0
    %v284 = vmax.f32 %v246, 0.0
    %v285 = vmax.f32 %v249, 0.0
    %v286 = vmax.f32 %v254, 0.0
    %v287 = vmax.f32 %v257, 0.0
    %v288 = vmax.f32 %v262, 0.0
    %v289 = vmax.f32 %v265, 0.0
    %v290 = vmax.f32 %v270, 0.0
    %v291 = vmax.f32 %v273, 0.0
    %v292 = vpack.c.bf16 %v277, %v276
    %v293 = vpack.c.bf16 %v279, %v278
    %v294 = vpack.c.bf16 %v281, %v280
    %v295 = vpack.c.bf16 %v283, %v282
    %v296 = vpack.c.bf16 %v285, %v284
    %v297 = vpack.c.bf16 %v287, %v286
    %v298 = vpack.c.bf16 %v289, %v288
    %v299 = vpack.c.bf16 %v291, %v290
    %v308 = vunpack.c.l.b16 %v292
    %v309 = vunpack.c.h.b16 %v292
    %v310 = vunpack.c.l.b16 %v293
    %v311 = vunpack.c.h.b16 %v293
    %v312 = vunpack.c.l.b16 %v294
    %v313 = vunpack.c.h.b16 %v294
    %v314 = vunpack.c.l.b16 %v295
    %v315 = vunpack.c.h.b16 %v295
    %v316 = vunpack.c.l.b16 %v296
    %v317 = vunpack.c.h.b16 %v296
    %v318 = vunpack.c.l.b16 %v297
    %v319 = vunpack.c.h.b16 %v297
    %v320 = vunpack.c.l.b16 %v298
    %v321 = vunpack.c.h.b16 %v298
    %v322 = vunpack.c.l.b16 %v299
    %v323 = vunpack.c.h.b16 %v299
    %v324 = vpack.c.b16 %v308, %v308
    %v325 = vpack.c.b16 %v309, %v309
    %v326 = vpack.c.b16 %v310, %v310
    %v327 = vpack.c.b16 %v311, %v311
    %v328 = vpack.c.b16 %v312, %v312
    %v329 = vpack.c.b16 %v313, %v313
    %v330 = vpack.c.b16 %v314, %v314
    %v331 = vpack.c.b16 %v315, %v315
    %v332 = vpack.c.b16 %v316, %v316
    %v333 = vpack.c.b16 %v317, %v317
    %v334 = vpack.c.b16 %v318, %v318
    %v335 = vpack.c.b16 %v319, %v319
    %v336 = vpack.c.b16 %v320, %v320
    %v337 = vpack.c.b16 %v321, %v321
    %v338 = vpack.c.b16 %v322, %v322
    %v339 = vpack.c.b16 %v323, %v323
    %356 = vst [vmem:[#allocation7] sm:$0xf] %v324
    %357 = vst [vmem:[#allocation7 + $0x4] sm:$0xf] %v325
    %358 = vst [vmem:[#allocation7 + $0x8] sm:$0xf] %v326
    %359 = vst [vmem:[#allocation7 + $0xc] sm:$0xf] %v327
    %360 = vst [vmem:[#allocation7 + $0x10] sm:$0xf] %v328
    %361 = vst [vmem:[#allocation7 + $0x14] sm:$0xf] %v329
    %362 = vst [vmem:[#allocation7 + $0x18] sm:$0xf] %v330
    %363 = vst [vmem:[#allocation7 + $0x1c] sm:$0xf] %v331
    %364 = vst [vmem:[#allocation7 + $0x20] sm:$0xf] %v332
    %365 = vst [vmem:[#allocation7 + $0x24] sm:$0xf] %v333
    %366 = vst [vmem:[#allocation7 + $0x28] sm:$0xf] %v334
    %367 = vst [vmem:[#allocation7 + $0x2c] sm:$0xf] %v335
    %368 = vst [vmem:[#allocation7 + $0x30] sm:$0xf] %v336
    %369 = vst [vmem:[#allocation7 + $0x34] sm:$0xf] %v337
    %370 = vst [vmem:[#allocation7 + $0x38] sm:$0xf] %v338
    %371 = vst [vmem:[#allocation7 + $0x3c] sm:$0xf] %v339
    // Predicated region
    $region22: #{tpu_custom_call.1} parent=1 // pred_check
      _
    $region23: #{tpu_custom_call.1} parent=1 // pred_check_branch
      %373 = sbr.rel (0) target = $region25
    $region24: #{tpu_custom_call.1} parent=1 // pred_region
      %s375 = ssub.s32 1024, 1024
      %376 = vsyncadd [#allocation4], %s375
      %s377 = sshll.u32 [#allocation7], 4
      %s378 = int_to_ptr.vmem [resolvable:$true] %s377
      %383 = dma.vmem_to_hbm [thread:$0]  %s378, 1024, %s3, [#allocation4], 64, 64, 4
    $region25: #{tpu_custom_call.1} parent=1 // pred_fallthru
      _
    // Predicated region
    $region26: #{tpu_custom_call.1} parent=1 // pred_check
      _
    $region27: #{tpu_custom_call.1} parent=1 // pred_check_branch
      %385 = sbr.rel (0) target = $region29
    $region28: #{tpu_custom_call.1} parent=1 // pred_region
      %386 = dma.done [#allocation4], 1024
    $region29: #{tpu_custom_call.1} parent=1 // pred_fallthru
      _
    %387 = vsyncpa [#allocation3], 1
    %388 = vsyncpa [#allocation6], 1
    %389 = vsyncpa [#allocation4], 1

</llo_original>
